<compile_context>
chip_gen: v6e
topology: v6e:2x2x1
jax: 0.10.0
libtpu: 0.0.40
codegen_flags: <defaults>
</compile_context>

<pallas_src>
import functools
import math

import jax
import jax.numpy as jnp
from jax.experimental import pallas as pl
from jax.experimental.pallas import tpu as pltpu

_LANES = 128


def _round_up(x, m):
    return ((x + m - 1) // m) * m


def _focal_rmse_kernel(pred_ref, target_ref, alpha_ref, out_ref, acc_ref,
                       *, gamma, eps, squared, count):
    step = pl.program_id(0)

    @pl.when(step == 0)
    def _init():
        acc_ref[...] = jnp.zeros_like(acc_ref)

    pred = pred_ref[...].astype(jnp.float32)     # (tr, 128)
    tgt = target_ref[...].astype(jnp.float32)    # (tr, 128)
    alpha = alpha_ref[...]                       # (tr, 128) f32, VMEM-resident

    err = jnp.abs(tgt - pred)
    sq = err * err
    base = 1.0 + err

    # Static gamma specialisation: avoid log/exp on the EUP for common cases.
    g = float(gamma)
    if g == 1.0:
        fw = base
    elif g == 0.0:
        fw = jnp.ones_like(base)
    elif g.is_integer() and 1.0 < g <= 8.0:
        fw = base
        for _ in range(int(g) - 1):
            fw = fw * base
    else:
        # base >= 1, so log is safe; explicit exp/log avoids relying on powf.
        fw = jnp.exp(jnp.float32(g) * jnp.log(base))

    # Elementwise accumulation (VPU); the cross-lane reduce is paid once below.
    acc_ref[...] += alpha * fw * sq

    @pl.when(step == pl.num_programs(0) - 1)
    def _finalize():
        mean_loss = jnp.sum(acc_ref[...]) / jnp.float32(count)
        if squared:
            res = jnp.sqrt(mean_loss + jnp.float32(eps))
        else:
            res = mean_loss + jnp.float32(eps)
        out_ref[...] = jnp.reshape(res, (1, 1))


def focal_rmse_loss(pred, target, alpha=None, gamma=1.0, eps=1e-6,
                    squared=True, max_block_rows=960):
    """JAX/Pallas equivalent of FocalRMSELoss.forward. Returns a scalar."""
    B, C = pred.shape
    n = B * C
    if alpha is None:
        alpha = jnp.ones((C,), dtype=jnp.float32)
    alpha = jnp.asarray(alpha, dtype=jnp.float32).reshape(C)

    # Block-row alignment: rows of the block must be a multiple of 8 (sublane
    # tiling) and block_rows*128 must be a multiple of C (so the alpha slab
    # pattern lines up for every block).
    p = C // math.gcd(C, _LANES)            # channel-pattern period, in rows
    row_align = (8 * p) // math.gcd(8, p)   # lcm(8, p)

    rows = -(-n // _LANES)
    tr = min(_round_up(max_block_rows, row_align), _round_up(rows, row_align))
    padded_rows = _round_up(rows, tr)
    grid_n = padded_rows // tr
    padded_n = padded_rows * _LANES

    # Lane-dense flattened inputs (zero padding contributes 0 to the sum).
    pred2d = jnp.pad(pred.reshape(-1), (0, padded_n - n)).reshape(padded_rows, _LANES)
    tgt2d = jnp.pad(target.reshape(-1), (0, padded_n - n)).reshape(padded_rows, _LANES)

    # Small alpha slab matching one block; valid for every block because
    # (block_start_row * 128) % C == 0.
    ch = (jnp.arange(tr * _LANES, dtype=jnp.int32) % C).reshape(tr, _LANES)
    alpha_slab = alpha[ch]                  # (tr, 128) float32

    kernel = functools.partial(
        _focal_rmse_kernel,
        gamma=float(gamma),
        eps=float(eps),
        squared=bool(squared),
        count=n,
    )

    out = pl.pallas_call(
        kernel,
        out_shape=jax.ShapeDtypeStruct((1, 1), jnp.float32),
        grid_spec=pltpu.PrefetchScalarGridSpec(
            num_scalar_prefetch=0,
            grid=(grid_n,),
            in_specs=[
                pl.BlockSpec((tr, _LANES), lambda i: (i, 0)),   # pred tiles
                pl.BlockSpec((tr, _LANES), lambda i: (i, 0)),   # target tiles
                pl.BlockSpec((tr, _LANES), lambda i: (0, 0)),   # alpha slab (resident)
            ],
            out_specs=pl.BlockSpec((1, 1), lambda i: (0, 0)),
            scratch_shapes=[pltpu.VMEM((tr, _LANES), jnp.float32)],
        ),
        compiler_params=pltpu.CompilerParams(
            dimension_semantics=("arbitrary",),   # streaming reduction axis
            vmem_limit_bytes=32 * 1024 * 1024,
        ),
    )(pred2d, tgt2d, alpha_slab)

    return out[0, 0]


def _reference(pred, target, alpha, gamma=1.0, eps=1e-6, squared=True):
    error = jnp.abs(target - pred)
    squared_error = error ** 2
    focal_weight = alpha[None, :] * (1.0 + error) ** gamma
    weighted_loss = focal_weight * squared_error
    mean_loss = jnp.mean(weighted_loss)
    return jnp.sqrt(mean_loss + eps) if squared else mean_loss + eps


if __name__ == "__main__":
    key = jax.random.PRNGKey(0)
    k1, k2, k3, k4 = jax.random.split(key, 4)

    # --- Test 1: small module-default case (B=16, C=5, alpha=ones, gamma=1) ---
    B, C = 16, 5
    pred = jax.random.normal(k1, (B, C), dtype=jnp.float32)
    target = jax.random.normal(k2, (B, C), dtype=jnp.float32)
    alpha = jnp.ones((C,), dtype=jnp.float32)

    loss = focal_rmse_loss(pred, target, alpha, gamma=1.0, eps=1e-6, squared=True)
    loss = jax.block_until_ready(loss)
    ref = _reference(pred, target, alpha, gamma=1.0, eps=1e-6, squared=True)
    assert jnp.allclose(loss, ref, rtol=1e-5, atol=1e-6), (loss, ref)

    # --- Test 2: multi-block grid (padding + accumulator across steps),
    #     non-uniform alpha, integer gamma=2 ---
    B2 = 2047  # B2*C not a multiple of 128 -> exercises zero-padding
    pred2 = jax.random.normal(k3, (B2, C), dtype=jnp.float32)
    target2 = jax.random.normal(k4, (B2, C), dtype=jnp.float32)
    alpha2 = jnp.array([1.0, 2.0, 0.5, 1.5, 1.0], dtype=jnp.float32)

    loss2 = focal_rmse_loss(pred2, target2, alpha2, gamma=2.0, eps=1e-6,
                            squared=True, max_block_rows=40)  # small blocks -> grid > 1
    loss2 = jax.block_until_ready(loss2)
    ref2 = _reference(pred2, target2, alpha2, gamma=2.0, eps=1e-6, squared=True)
    assert jnp.allclose(loss2, ref2, rtol=1e-5, atol=1e-6), (loss2, ref2)

    # --- Test 3: non-integer gamma path and squared=False ---
    loss3 = focal_rmse_loss(pred, target, alpha2, gamma=1.5, eps=1e-6, squared=False)
    loss3 = jax.block_until_ready(loss3)
    ref3 = _reference(pred, target, alpha2, gamma=1.5, eps=1e-6, squared=False)
    assert jnp.allclose(loss3, ref3, rtol=1e-5, atol=1e-6), (loss3, ref3)

    print("KERNEL_OK")
</pallas_src>

<mosaic_0001>
module attributes {stable_mosaic.version = 11 : i64} {
  func.func @_focal_rmse_kernel(%arg0: i32, %arg1: memref<40x128xf32, #tpu.memory_space<vmem>>, %arg2: memref<40x128xf32, #tpu.memory_space<vmem>>, %arg3: memref<40x128xf32, #tpu.memory_space<vmem>>, %arg4: memref<1x1xf32, #tpu.memory_space<vmem>>, %arg5: memref<40x128xf32, #tpu.memory_space<vmem>>) attributes {dimension_semantics = [#tpu.dimension_semantics<arbitrary>], iteration_bounds = array<i64: 1>, scalar_prefetch = 0 : i64, scratch_operands = 1 : i64, tpu.core_type = #tpu.core_type<tc>, window_params = [{transform_indices = @transform_0, window_bounds = array<i64: 40, 128>}, {transform_indices = @transform_1, window_bounds = array<i64: 40, 128>}, {pipeline_mode = #tpu.pipeline_mode<synchronous>, transform_indices = @transform_2, window_bounds = array<i64: 40, 128>}, {pipeline_mode = #tpu.pipeline_mode<synchronous>, transform_indices = @transform_3, window_bounds = array<i64: 1, 1>}]} {
    %c0_i32 = arith.constant 0 : i32
    %0 = arith.cmpi eq, %arg0, %c0_i32 : i32
    %1 = arith.extui %0 : i1 to i32
    %c0_i32_0 = arith.constant 0 : i32
    %2 = arith.cmpi ne, %1, %c0_i32_0 : i32
    scf.if %2 {
      %cst_12 = arith.constant 0.000000e+00 : f32
      %19 = vector.broadcast %cst_12 : f32 to vector<40x128xf32>
      %c0_13 = arith.constant 0 : index
      %c0_14 = arith.constant 0 : index
      %20 = vector.load %arg5[%c0_13, %c0_14] : memref<40x128xf32, #tpu.memory_space<vmem>>, vector<40x128xf32>
      tpu.vector_store %arg5[%c0_13, %c0_14], %19 {strides = array<i32>} : memref<40x128xf32, #tpu.memory_space<vmem>>, vector<40x128xf32>,
    } else {
    }
    %c0 = arith.constant 0 : index
    %c0_1 = arith.constant 0 : index
    %3 = vector.load %arg1[%c0, %c0_1] : memref<40x128xf32, #tpu.memory_space<vmem>>, vector<40x128xf32>
    %c0_2 = arith.constant 0 : index
    %c0_3 = arith.constant 0 : index
    %4 = vector.load %arg2[%c0_2, %c0_3] : memref<40x128xf32, #tpu.memory_space<vmem>>, vector<40x128xf32>
    %c0_4 = arith.constant 0 : index
    %c0_5 = arith.constant 0 : index
    %5 = vector.load %arg3[%c0_4, %c0_5] : memref<40x128xf32, #tpu.memory_space<vmem>>, vector<40x128xf32>
    %6 = arith.subf %4, %3 : vector<40x128xf32>
    %7 = math.absf %6 : vector<40x128xf32>
    %8 = arith.mulf %7, %7 : vector<40x128xf32>
    %cst = arith.constant 1.000000e+00 : f32
    %9 = vector.broadcast %cst : f32 to vector<40x128xf32>
    %10 = arith.addf %9, %7 : vector<40x128xf32>
    %c0_6 = arith.constant 0 : index
    %c0_7 = arith.constant 0 : index
    %11 = vector.load %arg5[%c0_6, %c0_7] : memref<40x128xf32, #tpu.memory_space<vmem>>, vector<40x128xf32>
    %12 = arith.mulf %5, %10 : vector<40x128xf32>
    %13 = arith.mulf %12, %8 : vector<40x128xf32>
    %14 = arith.addf %11, %13 : vector<40x128xf32>
    %c0_8 = arith.constant 0 : index
    %c0_9 = arith.constant 0 : index
    %15 = vector.load %arg5[%c0_8, %c0_9] : memref<40x128xf32, #tpu.memory_space<vmem>>, vector<40x128xf32>
    tpu.vector_store %arg5[%c0_8, %c0_9], %14 {strides = array<i32>} : memref<40x128xf32, #tpu.memory_space<vmem>>, vector<40x128xf32>,
    %c0_i32_10 = arith.constant 0 : i32
    %16 = arith.cmpi eq, %arg0, %c0_i32_10 : i32
    %17 = arith.extui %16 : i1 to i32
    %c0_i32_11 = arith.constant 0 : i32
    %18 = arith.cmpi ne, %17, %c0_i32_11 : i32
    scf.if %18 {
      %c0_12 = arith.constant 0 : index
      %c0_13 = arith.constant 0 : index
      %19 = vector.load %arg5[%c0_12, %c0_13] : memref<40x128xf32, #tpu.memory_space<vmem>>, vector<40x128xf32>
      %20 = vector.shape_cast %19 : vector<40x128xf32> to vector<1x40x128xf32>
      %cst_14 = arith.constant dense<0.000000e+00> : vector<1xf32>
      %21 = vector.multi_reduction <add>, %20, %cst_14 [1, 2] : vector<1x40x128xf32> to vector<1xf32>
      %22 = vector.shape_cast %21 : vector<1xf32> to vector<1x1x1xf32>
      %23 = vector.extract %22[0, 0, 0] : f32 from vector<1x1x1xf32>
      %cst_15 = arith.constant 8.000000e+01 : f32
      %24 = arith.divf %23, %cst_15 : f32
      %cst_16 = arith.constant 9.99999997E-7 : f32
      %25 = arith.addf %24, %cst_16 : f32
      %26 = math.sqrt %25 : f32
      %27 = vector.broadcast %26 : f32 to vector<1x1xf32>
      %c0_17 = arith.constant 0 : index
      %c0_18 = arith.constant 0 : index
      %28 = vector.load %arg4[%c0_17, %c0_18] : memref<1x1xf32, #tpu.memory_space<vmem>>, vector<1x1xf32>
      tpu.vector_store %arg4[%c0_17, %c0_18], %27 {strides = array<i32>} : memref<1x1xf32, #tpu.memory_space<vmem>>, vector<1x1xf32>,
    } else {
    }
    return
  }
  func.func @transform_0(%arg0: i32) -> (i32, i32) {
    %c0_i32 = arith.constant 0 : i32
    %c0_i32_0 = arith.constant 0 : i32
    return %arg0, %c0_i32 : i32, i32
  }
  func.func @transform_1(%arg0: i32) -> (i32, i32) {
    %c0_i32 = arith.constant 0 : i32
    %c0_i32_0 = arith.constant 0 : i32
    return %arg0, %c0_i32 : i32, i32
  }
  func.func @transform_2(%arg0: i32) -> (i32, i32) {
    %c0_i32 = arith.constant 0 : i32
    %c0_i32_0 = arith.constant 0 : i32
    %c0_i32_1 = arith.constant 0 : i32
    return %c0_i32, %c0_i32_0 : i32, i32
  }
  func.func @transform_3(%arg0: i32) -> (i32, i32) {
    %c0_i32 = arith.constant 0 : i32
    %c0_i32_0 = arith.constant 0 : i32
    %c0_i32_1 = arith.constant 0 : i32
    return %c0_i32, %c0_i32_0 : i32, i32
  }
}

</mosaic_0001>

<llo_original>
// kernel: tpu_custom_call.1
$region0: #{tpu_custom_call.1}
  #allocation0 [shape = 'u32[]', space=smem, size = 0x4, offset = 0x4, fixed_abs, tag = 'smem constant byte address 0x4 - core index']
  #allocation1 [shape = 'u32[144,128]{1,0:T(1,128)}', space=vmem, size = 0x12000, scoped, tag = 'internal scratch']
  #allocation2 [shape = 'f32[40,128]{1,0:T(8,128)}', space=vmem, size = 0x5000, scoped, tag = 'scratch operand']
  %s0 = inlined_call_operand.hbm [shape: f32[40,128], index: 0, kind: input, shape index: {}]
  %s1 = inlined_call_operand.hbm [shape: f32[40,128], index: 1, kind: input, shape index: {}]
  %s2 = inlined_call_operand.hbm [shape: f32[40,128], index: 2, kind: input, shape index: {}]
  %s3 = inlined_call_operand.hbm [shape: f32[1,1], index: 3, kind: output, shape index: {}]
  %s4 = sld [smem:[#allocation0]]
  $region42: #{tpu_custom_call.1} parent=0
    _
  %s6 = ssub.s32 1, %s4
  %s7 = scalar_select 0, %s6, %s4
  $region1: #{tpu_custom_call.1} parent=0
    #allocation3 [shape = 'u8[20480]{0}', space=vmem, size = 0x5000, scoped, tag = 'input window, operand 0, single buffered']
    #allocation4 [shape = 's32[1]{0}', space=sflag, size = 0x4, scoped, tag = 'scoped memory for tpu_custom_call.1']
    #allocation5 [shape = 's32[1]{0}', space=sflag, size = 0x4, scoped, tag = 'scoped memory for tpu_custom_call.1']
    #allocation6 [shape = 'u8[20480]{0}', space=vmem, size = 0x5000, scoped, tag = 'input window, operand 1, single buffered']
    #allocation7 [shape = 's32[1]{0}', space=sflag, size = 0x4, scoped, tag = 'scoped memory for tpu_custom_call.1']
    #allocation8 [shape = 'u8[20480]{0}', space=vmem, size = 0x5000, scoped, tag = 'input window, operand 2, single buffered']
    #allocation9 [shape = 'u8[512]{0}', space=vmem, size = 0x400, scoped, tag = 'output window, operand 0, single buffered']
    %8 = vsyncpa [#allocation4], 0
    %9 = vsyncpa [#allocation7], 0
    %10 = vsyncpa [#allocation5], 0
    // Predicated region
    $region2: #{tpu_custom_call.1} parent=1 // pred_check
      _
    $region3: #{tpu_custom_call.1} parent=1 // pred_check_branch
      %12 = sbr.rel (0) target = $region5
    $region4: #{tpu_custom_call.1} parent=1 // pred_region
      %s14 = ssub.s32 640, 640
      %15 = vsyncadd [#allocation4], %s14
      %s16 = sshll.u32 [#allocation3], 4
      %s17 = int_to_ptr.vmem [resolvable:$true] %s16
      %22 = dma.hbm_to_vmem [thread:$0]  %s0, 640, %s17, [#allocation4], 128, 128, 8
    $region5: #{tpu_custom_call.1} parent=1 // pred_fallthru
      _
    // Predicated region
    $region6: #{tpu_custom_call.1} parent=1 // pred_check
      _
    $region7: #{tpu_custom_call.1} parent=1 // pred_check_branch
      %24 = sbr.rel (0) target = $region9
    $region8: #{tpu_custom_call.1} parent=1 // pred_region
      %s26 = ssub.s32 640, 640
      %27 = vsyncadd [#allocation7], %s26
      %s28 = sshll.u32 [#allocation6], 4
      %s29 = int_to_ptr.vmem [resolvable:$true] %s28
      %34 = dma.hbm_to_vmem [thread:$0]  %s1, 640, %s29, [#allocation7], 128, 128, 8
    $region9: #{tpu_custom_call.1} parent=1 // pred_fallthru
      _
    // Predicated region
    $region10: #{tpu_custom_call.1} parent=1 // pred_check
      _
    $region11: #{tpu_custom_call.1} parent=1 // pred_check_branch
      %36 = sbr.rel (0) target = $region13
    $region12: #{tpu_custom_call.1} parent=1 // pred_region
      %s38 = ssub.s32 640, 640
      %39 = vsyncadd [#allocation7], %s38
      %s40 = sshll.u32 [#allocation8], 4
      %s41 = int_to_ptr.vmem [resolvable:$true] %s40
      %46 = dma.hbm_to_vmem [thread:$0]  %s2, 640, %s41, [#allocation7], 128, 128, 8
    $region13: #{tpu_custom_call.1} parent=1 // pred_fallthru
      _
    // Predicated region
    $region14: #{tpu_custom_call.1} parent=1 // pred_check
      _
    $region15: #{tpu_custom_call.1} parent=1 // pred_check_branch
      %48 = sbr.rel (0) target = $region17
    $region16: #{tpu_custom_call.1} parent=1 // pred_region
      %49 = dma.done [#allocation4], 640
    $region17: #{tpu_custom_call.1} parent=1 // pred_fallthru
      _
    // Predicated region
    $region18: #{tpu_custom_call.1} parent=1 // pred_check
      _
    $region19: #{tpu_custom_call.1} parent=1 // pred_check_branch
      %51 = sbr.rel (0) target = $region21
    $region20: #{tpu_custom_call.1} parent=1 // pred_region
      %52 = dma.done [#allocation7], 640
    $region21: #{tpu_custom_call.1} parent=1 // pred_fallthru
      _
    // Predicated region
    $region22: #{tpu_custom_call.1} parent=1 // pred_check
      _
    $region23: #{tpu_custom_call.1} parent=1 // pred_check_branch
      %54 = sbr.rel (0) target = $region25
    $region24: #{tpu_custom_call.1} parent=1 // pred_region
      %55 = dma.done [#allocation7], 640
    $region25: #{tpu_custom_call.1} parent=1 // pred_fallthru
      _
    %p56 = scmp.eq.s32.totalorder 0, 0
    // Predicated region
    $region26: #{tpu_custom_call.1} parent=1 // pred_check
      %p57 = pneg %p56
    $region27: #{tpu_custom_call.1} parent=1 // pred_check_branch
      %59 = sbr.rel (%p57) target = $region29
    $region28: #{tpu_custom_call.1} parent=1 // pred_region
      %60 = vst [vmem:[#allocation2] sm:$0xff] 0.0
      %61 = vst [vmem:[#allocation2 + $0x8] sm:$0xff] 0.0
      %62 = vst [vmem:[#allocation2 + $0x10] sm:$0xff] 0.0
      %63 = vst [vmem:[#allocation2 + $0x18] sm:$0xff] 0.0
      %64 = vst [vmem:[#allocation2 + $0x20] sm:$0xff] 0.0
    $region29: #{tpu_custom_call.1} parent=1 // pred_fallthru
      _
    %v65 = vld [vmem:[#allocation3] sm:$0xff]
    %v66 = vld [vmem:[#allocation3 + $0x8] sm:$0xff]
    %v67 = vld [vmem:[#allocation3 + $0x10] sm:$0xff]
    %v68 = vld [vmem:[#allocation3 + $0x18] sm:$0xff]
    %v69 = vld [vmem:[#allocation3 + $0x20] sm:$0xff]
    %v70 = vld [vmem:[#allocation6] sm:$0xff]
    %v71 = vld [vmem:[#allocation6 + $0x8] sm:$0xff]
    %v72 = vld [vmem:[#allocation6 + $0x10] sm:$0xff]
    %v73 = vld [vmem:[#allocation6 + $0x18] sm:$0xff]
    %v74 = vld [vmem:[#allocation6 + $0x20] sm:$0xff]
    %v75 = vld [vmem:[#allocation8] sm:$0xff]
    %v76 = vld [vmem:[#allocation8 + $0x8] sm:$0xff]
    %v77 = vld [vmem:[#allocation8 + $0x10] sm:$0xff]
    %v78 = vld [vmem:[#allocation8 + $0x18] sm:$0xff]
    %v79 = vld [vmem:[#allocation8 + $0x20] sm:$0xff]
    %v80 = vsub.f32 %v70, %v65
    %v81 = vsub.f32 %v71, %v66
    %v82 = vsub.f32 %v72, %v67
    %v83 = vsub.f32 %v73, %v68
    %v84 = vsub.f32 %v74, %v69
    %v85 = vand.u32 2147483647, %v80
    %v86 = vand.u32 2147483647, %v81
    %v87 = vand.u32 2147483647, %v82
    %v88 = vand.u32 2147483647, %v83
    %v89 = vand.u32 2147483647, %v84
    %v90 = vmul.f32 %v85, %v85
    %v91 = vmul.f32 %v86, %v86
    %v92 = vmul.f32 %v87, %v87
    %v93 = vmul.f32 %v88, %v88
    %v94 = vmul.f32 %v89, %v89
    %v95 = vadd.f32 %v85, 1.0
    %v96 = vadd.f32 %v86, 1.0
    %v97 = vadd.f32 %v87, 1.0
    %v98 = vadd.f32 %v88, 1.0
    %v99 = vadd.f32 %v89, 1.0
    %v100 = vld [vmem:[#allocation2] sm:$0xff]
    %v101 = vld [vmem:[#allocation2 + $0x8] sm:$0xff]
    %v102 = vld [vmem:[#allocation2 + $0x10] sm:$0xff]
    %v103 = vld [vmem:[#allocation2 + $0x18] sm:$0xff]
    %v104 = vld [vmem:[#allocation2 + $0x20] sm:$0xff]
    %v105 = vmul.f32 %v75, %v95
    %v106 = vmul.f32 %v76, %v96
    %v107 = vmul.f32 %v77, %v97
    %v108 = vmul.f32 %v78, %v98
    %v109 = vmul.f32 %v79, %v99
    %v110 = vmul.f32 %v105, %v90
    %v111 = vmul.f32 %v106, %v91
    %v112 = vmul.f32 %v107, %v92
    %v113 = vmul.f32 %v108, %v93
    %v114 = vmul.f32 %v109, %v94
    %v115 = vadd.f32 %v100, %v110
    %v116 = vadd.f32 %v101, %v111
    %v117 = vadd.f32 %v102, %v112
    %v118 = vadd.f32 %v103, %v113
    %v119 = vadd.f32 %v104, %v114
    %120 = vst [vmem:[#allocation2] sm:$0xff] %v115
    %121 = vst [vmem:[#allocation2 + $0x8] sm:$0xff] %v116
    %122 = vst [vmem:[#allocation2 + $0x10] sm:$0xff] %v117
    %123 = vst [vmem:[#allocation2 + $0x18] sm:$0xff] %v118
    %124 = vst [vmem:[#allocation2 + $0x20] sm:$0xff] %v119
    // Predicated region
    $region30: #{tpu_custom_call.1} parent=1 // pred_check
      %p125 = pneg %p56
    $region31: #{tpu_custom_call.1} parent=1 // pred_check_branch
      %127 = sbr.rel (%p125) target = $region33
    $region32: #{tpu_custom_call.1} parent=1 // pred_region
      %v128 = vld [vmem:[#allocation2] sm:$0xff]
      %v129 = vld [vmem:[#allocation2 + $0x8] sm:$0xff]
      %v130 = vld [vmem:[#allocation2 + $0x10] sm:$0xff]
      %v131 = vld [vmem:[#allocation2 + $0x18] sm:$0xff]
      %v132 = vld [vmem:[#allocation2 + $0x20] sm:$0xff]
      %v133 = vadd.f32 %v128, %v129
      %v134 = vadd.f32 %v133, %v130
      %v135 = vadd.f32 %v134, %v131
      %v136 = vadd.f32 %v135, %v132
      %137 = vadd.xlane.f32.xlu0 %v136
      %v138 = vpop.xlane.xlu0 %137
      %v139 = vrot.slane %v138, 4
      %v140 = vadd.f32 %v138, %v139
      %v141 = vrot.slane %v140, 2
      %v142 = vadd.f32 %v140, %v141
      %v143 = vrot.slane %v142, 1
      %v144 = vadd.f32 %v142, %v143
      %s145 = vtos %v144
      %v146 = vrcp.pop 80.0
      %s147 = vtos %v146
      %s148 = smul.f32 %s145, %s147
      %s149 = sadd.f32 %s148, 1e-06
      %v150 = vstv %s149
      %v151 = vrsqrt.pop %v150
      %v152 = vmul.f32 %v150, %v151
      %vm153 = vcmp.eq.f32.partialorder %v150, inf
      %v154 = vsel %vm153, %v150, %v152
      %vm155 = vcmp.eq.f32.partialorder %v150, 0.0
      %v156 = vand.u32 %v150, 2147483648
      %v157 = vsel %vm155, %v156, %v154
      %s158 = vtos %v157
      %v159 = vstv %s158
      %vm160 = vcmask 0
      %161 = vst.msk [vmem:[#allocation9] sm:$0x1] %vm160, %v159
    $region33: #{tpu_custom_call.1} parent=1 // pred_fallthru
      _
    // Predicated region
    $region34: #{tpu_custom_call.1} parent=1 // pred_check
      _
    $region35: #{tpu_custom_call.1} parent=1 // pred_check_branch
      %163 = sbr.rel (0) target = $region37
    $region36: #{tpu_custom_call.1} parent=1 // pred_region
      %s165 = ssub.s32 16, 16
      %166 = vsyncadd [#allocation5], %s165
      %s168 = sshll.u32 [#allocation9], 4
      %s169 = int_to_ptr.vmem [resolvable:$true] %s168
      %171 = dma.vmem_to_hbm [thread:$0]  %s169, 16, %s3, [#allocation5]
    $region37: #{tpu_custom_call.1} parent=1 // pred_fallthru
      _
    // Predicated region
    $region38: #{tpu_custom_call.1} parent=1 // pred_check
      _
    $region39: #{tpu_custom_call.1} parent=1 // pred_check_branch
      %173 = sbr.rel (0) target = $region41
    $region40: #{tpu_custom_call.1} parent=1 // pred_region
      %174 = dma.done [#allocation5], 16
    $region41: #{tpu_custom_call.1} parent=1 // pred_fallthru
      _
    %175 = vsyncpa [#allocation4], 1
    %176 = vsyncpa [#allocation7], 1
    %177 = vsyncpa [#allocation5], 1

</llo_original>
